<compile_context>
chip_gen: v7x
topology: tpu7x:2x2x1
jax: 0.10.0
libtpu: 0.0.40
codegen_flags: <defaults>
</compile_context>

<pallas_src>
import functools

import numpy as np
import jax
import jax.numpy as jnp
from jax.experimental import pallas as pl
from jax.experimental.pallas import tpu as pltpu

NUM_BODY_POINTS = 17
FOCAL = 5000.0


def _round_up(x, m):
    return ((x + m - 1) // m) * m


def _pick_block_b(batch):
    """Images per grid step: biggest divisor of batch <= 8 that still leaves
    >= 2 grid steps (keeps both v7x TensorCores busy via the parallel axis)."""
    cand = [d for d in range(min(8, batch), 0, -1) if batch % d == 0]
    for d in cand:
        if batch // d >= 2:
            return d
    return cand[0]


# ----------------------------------------------------------------------------
# Fused per-step kernel (BB images per step).
# Inputs (all f32):
#   scal_ref   (BB, 1, 4)        [w_img, h_img, w_tgt, h_tgt] per image
#   logits_ref (BB, 1, Q*C)      flattened class logits
#   qdata_ref  (BB, Q, 4+3+K)    [box cxcywh | cam s,tx,ty | det keypoints]
#   kp3d_ref   (BB, 3, Q, JPAD)  planar SMPL-X 3-D keypoints (lane-padded)
#   kp3db_ref  (BB, 3, Q, Jb)    planar body-joint subset
#   gtb_ref    (BB, 2, G, Jb)    planar raw GT body keypoints
# Output:
#   out_ref    (BB, 8, JPAD)     rows: u | v | x3 | y3 | z3 | kp_scaled |
#                                [score,idx,box4,cam3,gt_argmin,0...] | zeros
# ----------------------------------------------------------------------------
def _fused_kernel(scal_ref, logits_ref, qdata_ref, kp3d_ref, kp3db_ref, gtb_ref,
                  out_ref, *, num_classes, num_kp, jpad):
    f32 = jnp.float32

    scal = scal_ref[...][:, 0, :]                              # (BB, 4)
    w_img = scal[:, 0:1]
    h_img = scal[:, 1:2]
    w_tgt = scal[:, 2:3]
    h_tgt = scal[:, 3:4]

    # ---- top-1 on RAW logits (monotone sigmoid => identical argmax); -------
    # ---- sigmoid applied only to the single selected value. ----------------
    logits = logits_ref[...][:, 0, :].astype(f32)              # (BB, Q*C)
    m = jnp.max(logits, axis=-1, keepdims=True)                # (BB, 1)
    col = jax.lax.broadcasted_iota(jnp.int32, logits.shape, 1)
    big = jnp.int32(logits.shape[-1])
    flat_idx = jnp.min(jnp.where(logits >= m, col, big),
                       axis=-1, keepdims=True)                 # (BB, 1) first argmax
    score = jax.nn.sigmoid(m)                                  # (BB, 1)

    # division-free one-hot over queries of the selected flat index
    q_n = qdata_ref.shape[1]
    lo = jax.lax.broadcasted_iota(jnp.int32, (1, q_n), 1) * num_classes
    onehot = jnp.logical_and(flat_idx >= lo,
                             flat_idx < lo + num_classes).astype(f32)   # (BB, Q)

    # ---- selected query from the fused [box|cam|kpts] slab ------------------
    qdata = qdata_ref[...]                                     # (BB, Q, D)
    qsel = jnp.sum(qdata * onehot[:, :, None], axis=1)         # (BB, D)

    cam = qsel[:, 4:7]                                         # (BB, 3)
    s = cam[:, 0:1]
    tx = cam[:, 1:2]
    ty = cam[:, 2:3]
    cx = 0.5 * w_img
    cy = 0.5 * h_img
    # TODO(synk): the +1e-9 guards differ from raw torch division in
    # project_points_new; they only matter when s -> 0 or z + tz -> 0.
    tz = (2.0 * FOCAL) / (2.0 * cx * s + 1e-9)                 # (BB, 1)

    # ---- selected SMPL-X 3-D keypoints + perspective projection -------------
    oh3 = onehot[:, :, None]                                   # (BB, Q, 1)
    kp3d = kp3d_ref[...]                                       # (BB, 3, Q, JPAD)
    x3 = jnp.sum(kp3d[:, 0] * oh3, axis=1)                     # (BB, JPAD)
    y3 = jnp.sum(kp3d[:, 1] * oh3, axis=1)
    z3 = jnp.sum(kp3d[:, 2] * oh3, axis=1)
    inv_z = 1.0 / (z3 + tz + 1e-9)                             # exact division
    u = FOCAL * (x3 + tx) * inv_z + cx
    v = FOCAL * (y3 + ty) * inv_z + cy

    # ---- body-joint subset projection + L1 cost vs GT body keypoints --------
    kpb = kp3db_ref[...]                                       # (BB, 3, Q, Jb)
    xb = jnp.sum(kpb[:, 0] * oh3, axis=1)                      # (BB, Jb)
    yb = jnp.sum(kpb[:, 1] * oh3, axis=1)
    zb = jnp.sum(kpb[:, 2] * oh3, axis=1)
    inv_zb = 1.0 / (zb + tz + 1e-9)
    ub = FOCAL * (xb + tx) * inv_zb + cx
    vb = FOCAL * (yb + ty) * inv_zb + cy

    # TODO(synk): the 1/12 and 1/16 factors hardcode cfg.output_hm_shape.
    gtb = gtb_ref[...]                                         # (BB, 2, G, Jb)
    gx = gtb[:, 0] * (w_tgt * (1.0 / 12.0))[:, :, None]        # (BB, G, Jb)
    gy = gtb[:, 1] * (h_tgt * (1.0 / 16.0))[:, :, None]
    dx = jnp.sum(jnp.abs(ub[:, None, :] - gx), axis=-1)        # (BB, G)
    dy = jnp.sum(jnp.abs(vb[:, None, :] - gy), axis=-1)
    cost = dx / w_tgt + dy / h_tgt                             # (BB, G)

    # Hungarian matching with num_select == 1 degenerates to a row argmin.
    gmin = jnp.min(cost, axis=-1, keepdims=True)
    gcol = jax.lax.broadcasted_iota(jnp.int32, cost.shape, 1)
    gbig = jnp.int32(cost.shape[-1])
    gt_idx = jnp.min(jnp.where(cost <= gmin, gcol, gbig),
                     axis=-1, keepdims=True)                   # (BB, 1)

    # ---- selected box: cxcywh -> xyxy, scaled by target size ----------------
    bcx = qsel[:, 0:1]
    bcy = qsel[:, 1:2]
    bw = qsel[:, 2:3]
    bh = qsel[:, 3:4]
    x0 = (bcx - 0.5 * bw) * w_tgt
    y0 = (bcy - 0.5 * bh) * h_tgt
    x1 = (bcx + 0.5 * bw) * w_tgt
    y1 = (bcy + 0.5 * bh) * h_tgt

    # ---- selected detection keypoints: x/y scaled (in-kernel iota masks) ----
    ksel = qsel[:, 7:7 + num_kp]                               # (BB, K)
    pos = jax.lax.broadcasted_iota(jnp.int32, (1, num_kp), 1)
    is_xy = pos < 2 * NUM_BODY_POINTS
    is_x = jnp.bitwise_and(pos, 1) == 0
    mult = jnp.where(is_xy, jnp.where(is_x, w_tgt, h_tgt), 1.0)   # (BB, K)
    kp_scaled = ksel * mult

    # ---- pack everything into one lane-dense (BB, 8, JPAD) slab --------------
    bb = logits.shape[0]
    row5 = jnp.concatenate(
        [kp_scaled, jnp.zeros((bb, jpad - num_kp), f32)], axis=-1)
    row6 = jnp.concatenate(
        [score, flat_idx.astype(f32), x0, y0, x1, y1, cam,
         gt_idx.astype(f32), jnp.zeros((bb, jpad - 10), f32)], axis=-1)
    row7 = jnp.zeros((bb, jpad), f32)
    out_ref[...] = jnp.stack([u, v, x3, y3, z3, row5, row6, row7], axis=1)


# ----------------------------------------------------------------------------
# Forward pass (PostProcess_SMPLX_Multi.forward, num_select == 1 as in source)
# ----------------------------------------------------------------------------
def postprocess_smplx_multi(outputs, target_sizes, data_batch_nc, body_joint_idx):
    logits = outputs['pred_logits'].astype(jnp.float32)      # (B, Q, C)
    bbox = outputs['pred_boxes'].astype(jnp.float32)          # (B, Q, 4)
    kpts = outputs['pred_keypoints'].astype(jnp.float32)      # (B, Q, 3*17)
    pose = outputs['pred_smpl_fullpose']                      # (B, Q, 159)
    beta = outputs['pred_smpl_beta']                          # (B, Q, 10)
    expr = outputs['pred_smpl_expr']                          # (B, Q, 10)
    cam = outputs['pred_smpl_cam'].astype(jnp.float32)        # (B, Q, 3)
    kp3d = outputs['pred_smpl_kp3d'].astype(jnp.float32)      # (B, Q, J, 3)
    verts = outputs['pred_smpl_verts']                        # (B, Q, V, 3)

    B, Q, C = logits.shape
    J = kp3d.shape[-2]
    K = kpts.shape[-1]
    body_joint_idx = jnp.asarray(body_joint_idx, jnp.int32)
    Jb = int(body_joint_idx.shape[0])

    joint_img = data_batch_nc['joint_img'].astype(jnp.float32)    # (B, G, J, 3)
    G = joint_img.shape[1]

    JPAD = _round_up(max(J, K, 16), 128)
    BB = _pick_block_b(B)

    # Per-image scalars [w_img, h_img, w_tgt, h_tgt] as one tiny VMEM input.
    img_shape = data_batch_nc['img_shape'].astype(jnp.float32)    # (B, 2) = (h, w)
    img_wh = img_shape[:, ::-1]                                   # (w, h) camera center
    ts = target_sizes.astype(jnp.float32)                         # (B, 2) = (h, w)
    wh_t = ts[:, ::-1]                                            # (w, h) box/kp scaling
    scal = jnp.concatenate([img_wh, wh_t], axis=-1).reshape(B, 1, 4)

    # Layout plumbing (once, in the wrapper): lane-dense planar tensors.
    logits_flat = logits.reshape(B, 1, Q * C)
    qdata = jnp.concatenate([bbox, cam, kpts], axis=-1)           # (B, Q, 4+3+K)
    D = qdata.shape[-1]
    kp3d_pl = jnp.transpose(kp3d, (0, 3, 1, 2))                   # (B, 3, Q, J)
    kp3d_body_pl = kp3d_pl[:, :, :, body_joint_idx]               # (B, 3, Q, Jb)
    kp3d_pl_pad = jnp.pad(kp3d_pl, ((0, 0), (0, 0), (0, 0), (0, JPAD - J)))
    gt_body_pl = jnp.transpose(joint_img[..., :2],
                               (0, 3, 1, 2))[:, :, :, body_joint_idx]  # (B, 2, G, Jb)

    kernel = functools.partial(_fused_kernel, num_classes=C, num_kp=K, jpad=JPAD)

    out = pl.pallas_call(
        kernel,
        out_shape=jax.ShapeDtypeStruct((B, 8, JPAD), jnp.float32),
        grid=(B // BB,),
        in_specs=[
            pl.BlockSpec((BB, 1, 4), lambda i: (i, 0, 0)),
            pl.BlockSpec((BB, 1, Q * C), lambda i: (i, 0, 0)),
            pl.BlockSpec((BB, Q, D), lambda i: (i, 0, 0)),
            pl.BlockSpec((BB, 3, Q, JPAD), lambda i: (i, 0, 0, 0)),
            pl.BlockSpec((BB, 3, Q, Jb), lambda i: (i, 0, 0, 0)),
            pl.BlockSpec((BB, 2, G, Jb), lambda i: (i, 0, 0, 0)),
        ],
        out_specs=pl.BlockSpec((BB, 8, JPAD), lambda i: (i, 0, 0)),
        compiler_params=pltpu.CompilerParams(dimension_semantics=("parallel",)),
    )(scal, logits_flat, qdata, kp3d_pl_pad, kp3d_body_pl, gt_body_pl)

    # ---- unpack the single packed slab ---------------------------------------
    u = out[:, 0, :J]
    v = out[:, 1, :J]
    kp2d_sel = jnp.stack([u, v], axis=-1)                           # (B, J, 2)
    kp3d_sel = jnp.transpose(out[:, 2:5, :J], (0, 2, 1))            # (B, J, 3)
    kp_sel = out[:, 5, :K]                                          # (B, 51) scaled
    srow = out[:, 6, :]
    scores = srow[:, 0]
    flat_idx = jnp.round(srow[:, 1]).astype(jnp.int32)
    boxes_sel = srow[:, 2:6]                                        # (B, 4) xyxy px
    cam_sel = srow[:, 6:9]                                          # (B, 3)
    gt_ind = jnp.round(srow[:, 9]).astype(jnp.int32)                # (B,)

    topk_q = flat_idx // C
    labels = flat_idx % C

    # keypoints_res interleaving [x, y, v] per joint
    Z = kp_sel[:, :2 * NUM_BODY_POINTS]
    V = kp_sel[:, 2 * NUM_BODY_POINTS:]
    kp_res = jnp.stack([Z[:, 0::2], Z[:, 1::2], V],
                       axis=-1).reshape(B, 3 * NUM_BODY_POINTS)

    bar = jnp.arange(B)
    pose_sel = pose[bar, topk_q]
    beta_sel = beta[bar, topk_q]
    expr_sel = expr[bar, topk_q]
    verts_sel = verts[bar, topk_q]

    joint_cam = data_batch_nc['joint_cam'].astype(jnp.float32)      # (B, G, J, 3)

    # TODO(synk): general scipy.optimize.linear_sum_assignment has no Pallas
    # equivalent; with num_select == 1 it is the in-kernel argmin (gt_ind).
    result = {
        'scores': scores,
        'labels': labels,
        'boxes': boxes_sel,
        'keypoints': kp_res,
        'smplx_root_pose': pose_sel[:, :3],
        'smplx_body_pose': pose_sel[:, 3:66],
        'smplx_lhand_pose': pose_sel[:, 66:111],
        'smplx_rhand_pose': pose_sel[:, 111:156],
        'smplx_jaw_pose': pose_sel[:, 156:],
        'smplx_shape': beta_sel,
        'smplx_expr': expr_sel,
        'cam_trans': cam_sel,
        'smplx_mesh_cam': verts_sel,
        # TODO(synk): GT vertices require the SMPL-X body-model forward (external
        # model files, LBS); emitting zeros with the matching shape instead.
        'smplx_mesh_cam_target': jnp.zeros_like(verts_sel),
        'gt_smpl_kp3d': joint_cam.reshape(B * G, J, 3),
        'smplx_joint_proj': kp2d_sel,
        'img': data_batch_nc['img'],
        'bb2img_trans': data_batch_nc['bb2img_trans'],
        'img_shape': img_wh,                              # one instance per image
        'gt_ann_idx': data_batch_nc['ann_idx'][bar],      # repeated len(gt_ind_i)=1
        'gt_indices': gt_ind,
        'pred_smpl_kp3d': kp3d_sel,
    }
    return [result]


# ----------------------------------------------------------------------------
if __name__ == "__main__":
    key = jax.random.PRNGKey(0)
    B, Q, C = 2, 8, 4
    J = 137          # SMPL-X 137 keypoints (hardcoded in the module's gather)
    Vtx = 64         # reduced vertex count (real SMPL-X has 10475; shape-generic)
    G = 3            # GT instances per image
    ks = jax.random.split(key, 16)

    outputs = {
        'pred_logits': jax.random.normal(ks[0], (B, Q, C), jnp.float32),
        'pred_boxes': jax.random.uniform(ks[1], (B, Q, 4), jnp.float32, 0.2, 0.8),
        'pred_keypoints': jax.random.uniform(ks[2], (B, Q, 3 * NUM_BODY_POINTS), jnp.float32),
        'pred_smpl_fullpose': 0.1 * jax.random.normal(ks[3], (B, Q, 159), jnp.float32),
        'pred_smpl_beta': 0.1 * jax.random.normal(ks[4], (B, Q, 10), jnp.float32),
        'pred_smpl_expr': 0.1 * jax.random.normal(ks[5], (B, Q, 10), jnp.float32),
        'pred_smpl_cam': jnp.concatenate(
            [jax.random.uniform(ks[6], (B, Q, 1), jnp.float32, 0.5, 1.5),
             0.1 * jax.random.normal(ks[7], (B, Q, 2), jnp.float32)], axis=-1),
        'pred_smpl_kp3d': 0.3 * jax.random.normal(ks[8], (B, Q, J, 3), jnp.float32),
        'pred_smpl_verts': 0.3 * jax.random.normal(ks[9], (B, Q, Vtx, 3), jnp.float32),
    }
    target_sizes = jnp.array([[512.0, 384.0], [480.0, 640.0]], jnp.float32)   # (h, w)
    data_batch_nc = {
        'img_shape': jnp.array([[512.0, 384.0], [480.0, 640.0]], jnp.float32),
        'joint_img': jax.random.uniform(ks[10], (B, G, J, 3), jnp.float32, 0.0, 12.0),
        'joint_cam': 0.3 * jax.random.normal(ks[11], (B, G, J, 3), jnp.float32),
        'bb2img_trans': jax.random.normal(ks[12], (B, 2, 3), jnp.float32),
        'ann_idx': jnp.arange(B, dtype=jnp.int32),
        'img': jax.random.uniform(ks[13], (B, 3, 16, 16), jnp.float32),
    }
    # synthetic smpl_x.joint_part['body'] index set (deterministic)
    body_joint_idx = jnp.arange(25, dtype=jnp.int32)

    results = postprocess_smplx_multi(outputs, target_sizes, data_batch_nc, body_joint_idx)
    jax.block_until_ready(results)
    print("KERNEL_OK")
</pallas_src>

<mosaic_0001>
module attributes {stable_mosaic.version = 11 : i64} {
  func.func @_fused_kernel(%arg0: i32, %arg1: memref<1x1x4xf32, #tpu.memory_space<vmem>>, %arg2: memref<1x1x32xf32, #tpu.memory_space<vmem>>, %arg3: memref<1x8x58xf32, #tpu.memory_space<vmem>>, %arg4: memref<1x3x8x256xf32, #tpu.memory_space<vmem>>, %arg5: memref<1x3x8x25xf32, #tpu.memory_space<vmem>>, %arg6: memref<1x2x3x25xf32, #tpu.memory_space<vmem>>, %arg7: memref<1x8x256xf32, #tpu.memory_space<vmem>>) attributes {dimension_semantics = [#tpu.dimension_semantics<parallel>], iteration_bounds = array<i64: 2>, scalar_prefetch = 0 : i64, scratch_operands = 0 : i64, tpu.core_type = #tpu.core_type<tc>, window_params = [{transform_indices = @transform_0, window_bounds = array<i64: 1, 1, 4>}, {transform_indices = @transform_1, window_bounds = array<i64: 1, 1, 32>}, {transform_indices = @transform_2, window_bounds = array<i64: 1, 8, 58>}, {transform_indices = @transform_3, window_bounds = array<i64: 1, 3, 8, 256>}, {transform_indices = @transform_4, window_bounds = array<i64: 1, 3, 8, 25>}, {transform_indices = @transform_5, window_bounds = array<i64: 1, 2, 3, 25>}, {transform_indices = @transform_6, window_bounds = array<i64: 1, 8, 256>}]} {
    %c0 = arith.constant 0 : index
    %c0_0 = arith.constant 0 : index
    %c0_1 = arith.constant 0 : index
    %0 = vector.load %arg1[%c0, %c0_0, %c0_1] : memref<1x1x4xf32, #tpu.memory_space<vmem>>, vector<1x1x4xf32>
    %1 = vector.shape_cast %0 : vector<1x1x4xf32> to vector<1x4xf32>
    %2 = vector.extract_strided_slice %1 {offsets = [0, 0], sizes = [1, 1], strides = [1, 1]} : vector<1x4xf32> to vector<1x1xf32>
    %3 = vector.extract_strided_slice %1 {offsets = [0, 1], sizes = [1, 1], strides = [1, 1]} : vector<1x4xf32> to vector<1x1xf32>
    %4 = vector.extract_strided_slice %1 {offsets = [0, 2], sizes = [1, 1], strides = [1, 1]} : vector<1x4xf32> to vector<1x1xf32>
    %5 = vector.extract_strided_slice %1 {offsets = [0, 3], sizes = [1, 1], strides = [1, 1]} : vector<1x4xf32> to vector<1x1xf32>
    %c0_2 = arith.constant 0 : index
    %c0_3 = arith.constant 0 : index
    %c0_4 = arith.constant 0 : index
    %6 = vector.load %arg2[%c0_2, %c0_3, %c0_4] : memref<1x1x32xf32, #tpu.memory_space<vmem>>, vector<1x1x32xf32>
    %7 = vector.shape_cast %6 : vector<1x1x32xf32> to vector<1x32xf32>
    %cst = arith.constant dense<0xFF800000> : vector<1xf32>
    %8 = vector.multi_reduction <maximumf>, %7, %cst [1] : vector<1x32xf32> to vector<1xf32>
    %9 = vector.shape_cast %8 : vector<1xf32> to vector<1x1xf32>
    %10 = tpu.iota {dimensions = array<i32: 1>} : vector<1x32xi32>
    %11 = vector.broadcast %9 : vector<1x1xf32> to vector<1x32xf32>
    %12 = arith.cmpf oge, %7, %11 : vector<1x32xf32>
    %c32_i32 = arith.constant 32 : i32
    %13 = vector.broadcast %c32_i32 : i32 to vector<1x32xi32>
    %14 = arith.select %12, %10, %13 : vector<1x32xi1>, vector<1x32xi32>
    %cst_5 = arith.constant dense<2147483647> : vector<1xi32>
    %15 = vector.multi_reduction <minsi>, %14, %cst_5 [1] : vector<1x32xi32> to vector<1xi32>
    %16 = vector.shape_cast %15 : vector<1xi32> to vector<1x1xi32>
    %17 = arith.negf %9 : vector<1x1xf32>
    %18 = math.exp %17 : vector<1x1xf32>
    %cst_6 = arith.constant 1.000000e+00 : f32
    %19 = vector.broadcast %cst_6 : f32 to vector<1x1xf32>
    %20 = arith.addf %19, %18 : vector<1x1xf32>
    %21 = arith.divf %19, %20 : vector<1x1xf32>
    %22 = tpu.iota {dimensions = array<i32: 1>} : vector<1x8xi32>
    %c4_i32 = arith.constant 4 : i32
    %23 = vector.broadcast %c4_i32 : i32 to vector<1x8xi32>
    %24 = arith.muli %22, %23 : vector<1x8xi32>
    %25 = vector.broadcast %16 : vector<1x1xi32> to vector<1x8xi32>
    %26 = arith.cmpi sge, %25, %24 : vector<1x8xi32>
    %c4_i32_7 = arith.constant 4 : i32
    %27 = vector.broadcast %c4_i32_7 : i32 to vector<1x8xi32>
    %28 = arith.addi %24, %27 : vector<1x8xi32>
    %29 = vector.broadcast %16 : vector<1x1xi32> to vector<1x8xi32>
    %30 = arith.cmpi slt, %29, %28 : vector<1x8xi32>
    %31 = arith.andi %26, %30 : vector<1x8xi1>
    %32 = arith.extui %31 : vector<1x8xi1> to vector<1x8xi32>
    %33 = arith.sitofp %32 : vector<1x8xi32> to vector<1x8xf32>
    %c0_8 = arith.constant 0 : index
    %c0_9 = arith.constant 0 : index
    %c0_10 = arith.constant 0 : index
    %34 = vector.load %arg3[%c0_8, %c0_9, %c0_10] : memref<1x8x58xf32, #tpu.memory_space<vmem>>, vector<1x8x58xf32>
    %35 = vector.shape_cast %33 : vector<1x8xf32> to vector<1x8x1xf32>
    %36 = vector.broadcast %35 : vector<1x8x1xf32> to vector<1x8x58xf32>
    %37 = arith.mulf %34, %36 : vector<1x8x58xf32>
    %cst_11 = arith.constant dense<0.000000e+00> : vector<1x58xf32>
    %38 = vector.multi_reduction <add>, %37, %cst_11 [1] : vector<1x8x58xf32> to vector<1x58xf32>
    %39 = vector.extract_strided_slice %38 {offsets = [0, 4], sizes = [1, 3], strides = [1, 1]} : vector<1x58xf32> to vector<1x3xf32>
    %40 = vector.extract_strided_slice %39 {offsets = [0, 0], sizes = [1, 1], strides = [1, 1]} : vector<1x3xf32> to vector<1x1xf32>
    %41 = vector.extract_strided_slice %39 {offsets = [0, 1], sizes = [1, 1], strides = [1, 1]} : vector<1x3xf32> to vector<1x1xf32>
    %42 = vector.extract_strided_slice %39 {offsets = [0, 2], sizes = [1, 1], strides = [1, 1]} : vector<1x3xf32> to vector<1x1xf32>
    %cst_12 = arith.constant 5.000000e-01 : f32
    %43 = vector.broadcast %cst_12 : f32 to vector<1x1xf32>
    %44 = arith.mulf %43, %2 : vector<1x1xf32>
    %cst_13 = arith.constant 5.000000e-01 : f32
    %45 = vector.broadcast %cst_13 : f32 to vector<1x1xf32>
    %46 = arith.mulf %45, %3 : vector<1x1xf32>
    %cst_14 = arith.constant 2.000000e+00 : f32
    %47 = vector.broadcast %cst_14 : f32 to vector<1x1xf32>
    %48 = arith.mulf %47, %44 : vector<1x1xf32>
    %49 = arith.mulf %48, %40 : vector<1x1xf32>
    %cst_15 = arith.constant 9.99999971E-10 : f32
    %50 = vector.broadcast %cst_15 : f32 to vector<1x1xf32>
    %51 = arith.addf %49, %50 : vector<1x1xf32>
    %cst_16 = arith.constant 1.000000e+04 : f32
    %52 = vector.broadcast %cst_16 : f32 to vector<1x1xf32>
    %53 = arith.divf %52, %51 : vector<1x1xf32>
    %54 = vector.shape_cast %33 : vector<1x8xf32> to vector<1x8x1xf32>
    %c0_17 = arith.constant 0 : index
    %c0_18 = arith.constant 0 : index
    %c0_19 = arith.constant 0 : index
    %c0_20 = arith.constant 0 : index
    %55 = vector.load %arg4[%c0_17, %c0_18, %c0_19, %c0_20] : memref<1x3x8x256xf32, #tpu.memory_space<vmem>>, vector<1x3x8x256xf32>
    %56 = vector.extract_strided_slice %55 {offsets = [0, 0, 0, 0], sizes = [1, 1, 8, 256], strides = [1, 1, 1, 1]} : vector<1x3x8x256xf32> to vector<1x1x8x256xf32>
    %57 = vector.shape_cast %56 : vector<1x1x8x256xf32> to vector<1x8x256xf32>
    %58 = vector.broadcast %54 : vector<1x8x1xf32> to vector<1x8x256xf32>
    %59 = arith.mulf %57, %58 : vector<1x8x256xf32>
    %cst_21 = arith.constant dense<0.000000e+00> : vector<1x256xf32>
    %60 = vector.multi_reduction <add>, %59, %cst_21 [1] : vector<1x8x256xf32> to vector<1x256xf32>
    %61 = vector.extract_strided_slice %55 {offsets = [0, 1, 0, 0], sizes = [1, 1, 8, 256], strides = [1, 1, 1, 1]} : vector<1x3x8x256xf32> to vector<1x1x8x256xf32>
    %62 = vector.shape_cast %61 : vector<1x1x8x256xf32> to vector<1x8x256xf32>
    %63 = vector.broadcast %54 : vector<1x8x1xf32> to vector<1x8x256xf32>
    %64 = arith.mulf %62, %63 : vector<1x8x256xf32>
    %cst_22 = arith.constant dense<0.000000e+00> : vector<1x256xf32>
    %65 = vector.multi_reduction <add>, %64, %cst_22 [1] : vector<1x8x256xf32> to vector<1x256xf32>
    %66 = vector.extract_strided_slice %55 {offsets = [0, 2, 0, 0], sizes = [1, 1, 8, 256], strides = [1, 1, 1, 1]} : vector<1x3x8x256xf32> to vector<1x1x8x256xf32>
    %67 = vector.shape_cast %66 : vector<1x1x8x256xf32> to vector<1x8x256xf32>
    %68 = vector.broadcast %54 : vector<1x8x1xf32> to vector<1x8x256xf32>
    %69 = arith.mulf %67, %68 : vector<1x8x256xf32>
    %cst_23 = arith.constant dense<0.000000e+00> : vector<1x256xf32>
    %70 = vector.multi_reduction <add>, %69, %cst_23 [1] : vector<1x8x256xf32> to vector<1x256xf32>
    %71 = vector.broadcast %53 : vector<1x1xf32> to vector<1x256xf32>
    %72 = arith.addf %70, %71 : vector<1x256xf32>
    %cst_24 = arith.constant 9.99999971E-10 : f32
    %73 = vector.broadcast %cst_24 : f32 to vector<1x256xf32>
    %74 = arith.addf %72, %73 : vector<1x256xf32>
    %cst_25 = arith.constant 1.000000e+00 : f32
    %75 = vector.broadcast %cst_25 : f32 to vector<1x256xf32>
    %76 = arith.divf %75, %74 : vector<1x256xf32>
    %77 = vector.broadcast %41 : vector<1x1xf32> to vector<1x256xf32>
    %78 = arith.addf %60, %77 : vector<1x256xf32>
    %cst_26 = arith.constant 5.000000e+03 : f32
    %79 = vector.broadcast %cst_26 : f32 to vector<1x256xf32>
    %80 = arith.mulf %79, %78 : vector<1x256xf32>
    %81 = arith.mulf %80, %76 : vector<1x256xf32>
    %82 = vector.broadcast %44 : vector<1x1xf32> to vector<1x256xf32>
    %83 = arith.addf %81, %82 : vector<1x256xf32>
    %84 = vector.broadcast %42 : vector<1x1xf32> to vector<1x256xf32>
    %85 = arith.addf %65, %84 : vector<1x256xf32>
    %cst_27 = arith.constant 5.000000e+03 : f32
    %86 = vector.broadcast %cst_27 : f32 to vector<1x256xf32>
    %87 = arith.mulf %86, %85 : vector<1x256xf32>
    %88 = arith.mulf %87, %76 : vector<1x256xf32>
    %89 = vector.broadcast %46 : vector<1x1xf32> to vector<1x256xf32>
    %90 = arith.addf %88, %89 : vector<1x256xf32>
    %c0_28 = arith.constant 0 : index
    %c0_29 = arith.constant 0 : index
    %c0_30 = arith.constant 0 : index
    %c0_31 = arith.constant 0 : index
    %91 = vector.load %arg5[%c0_28, %c0_29, %c0_30, %c0_31] : memref<1x3x8x25xf32, #tpu.memory_space<vmem>>, vector<1x3x8x25xf32>
    %92 = vector.extract_strided_slice %91 {offsets = [0, 0, 0, 0], sizes = [1, 1, 8, 25], strides = [1, 1, 1, 1]} : vector<1x3x8x25xf32> to vector<1x1x8x25xf32>
    %93 = vector.shape_cast %92 : vector<1x1x8x25xf32> to vector<1x8x25xf32>
    %94 = vector.broadcast %54 : vector<1x8x1xf32> to vector<1x8x25xf32>
    %95 = arith.mulf %93, %94 : vector<1x8x25xf32>
    %cst_32 = arith.constant dense<0.000000e+00> : vector<1x25xf32>
    %96 = vector.multi_reduction <add>, %95, %cst_32 [1] : vector<1x8x25xf32> to vector<1x25xf32>
    %97 = vector.extract_strided_slice %91 {offsets = [0, 1, 0, 0], sizes = [1, 1, 8, 25], strides = [1, 1, 1, 1]} : vector<1x3x8x25xf32> to vector<1x1x8x25xf32>
    %98 = vector.shape_cast %97 : vector<1x1x8x25xf32> to vector<1x8x25xf32>
    %99 = vector.broadcast %54 : vector<1x8x1xf32> to vector<1x8x25xf32>
    %100 = arith.mulf %98, %99 : vector<1x8x25xf32>
    %cst_33 = arith.constant dense<0.000000e+00> : vector<1x25xf32>
    %101 = vector.multi_reduction <add>, %100, %cst_33 [1] : vector<1x8x25xf32> to vector<1x25xf32>
    %102 = vector.extract_strided_slice %91 {offsets = [0, 2, 0, 0], sizes = [1, 1, 8, 25], strides = [1, 1, 1, 1]} : vector<1x3x8x25xf32> to vector<1x1x8x25xf32>
    %103 = vector.shape_cast %102 : vector<1x1x8x25xf32> to vector<1x8x25xf32>
    %104 = vector.broadcast %54 : vector<1x8x1xf32> to vector<1x8x25xf32>
    %105 = arith.mulf %103, %104 : vector<1x8x25xf32>
    %cst_34 = arith.constant dense<0.000000e+00> : vector<1x25xf32>
    %106 = vector.multi_reduction <add>, %105, %cst_34 [1] : vector<1x8x25xf32> to vector<1x25xf32>
    %107 = vector.broadcast %53 : vector<1x1xf32> to vector<1x25xf32>
    %108 = arith.addf %106, %107 : vector<1x25xf32>
    %cst_35 = arith.constant 9.99999971E-10 : f32
    %109 = vector.broadcast %cst_35 : f32 to vector<1x25xf32>
    %110 = arith.addf %108, %109 : vector<1x25xf32>
    %cst_36 = arith.constant 1.000000e+00 : f32
    %111 = vector.broadcast %cst_36 : f32 to vector<1x25xf32>
    %112 = arith.divf %111, %110 : vector<1x25xf32>
    %113 = vector.broadcast %41 : vector<1x1xf32> to vector<1x25xf32>
    %114 = arith.addf %96, %113 : vector<1x25xf32>
    %cst_37 = arith.constant 5.000000e+03 : f32
    %115 = vector.broadcast %cst_37 : f32 to vector<1x25xf32>
    %116 = arith.mulf %115, %114 : vector<1x25xf32>
    %117 = arith.mulf %116, %112 : vector<1x25xf32>
    %118 = vector.broadcast %44 : vector<1x1xf32> to vector<1x25xf32>
    %119 = arith.addf %117, %118 : vector<1x25xf32>
    %120 = vector.broadcast %42 : vector<1x1xf32> to vector<1x25xf32>
    %121 = arith.addf %101, %120 : vector<1x25xf32>
    %cst_38 = arith.constant 5.000000e+03 : f32
    %122 = vector.broadcast %cst_38 : f32 to vector<1x25xf32>
    %123 = arith.mulf %122, %121 : vector<1x25xf32>
    %124 = arith.mulf %123, %112 : vector<1x25xf32>
    %125 = vector.broadcast %46 : vector<1x1xf32> to vector<1x25xf32>
    %126 = arith.addf %124, %125 : vector<1x25xf32>
    %c0_39 = arith.constant 0 : index
    %c0_40 = arith.constant 0 : index
    %c0_41 = arith.constant 0 : index
    %c0_42 = arith.constant 0 : index
    %127 = vector.load %arg6[%c0_39, %c0_40, %c0_41, %c0_42] : memref<1x2x3x25xf32, #tpu.memory_space<vmem>>, vector<1x2x3x25xf32>
    %128 = vector.extract_strided_slice %127 {offsets = [0, 0, 0, 0], sizes = [1, 1, 3, 25], strides = [1, 1, 1, 1]} : vector<1x2x3x25xf32> to vector<1x1x3x25xf32>
    %129 = vector.shape_cast %128 : vector<1x1x3x25xf32> to vector<1x3x25xf32>
    %cst_43 = arith.constant 0.0833333358 : f32
    %130 = vector.broadcast %cst_43 : f32 to vector<1x1xf32>
    %131 = arith.mulf %4, %130 : vector<1x1xf32>
    %132 = vector.shape_cast %131 : vector<1x1xf32> to vector<1x1x1xf32>
    %133 = vector.broadcast %132 : vector<1x1x1xf32> to vector<1x3x25xf32>
    %134 = arith.mulf %129, %133 : vector<1x3x25xf32>
    %135 = vector.extract_strided_slice %127 {offsets = [0, 1, 0, 0], sizes = [1, 1, 3, 25], strides = [1, 1, 1, 1]} : vector<1x2x3x25xf32> to vector<1x1x3x25xf32>
    %136 = vector.shape_cast %135 : vector<1x1x3x25xf32> to vector<1x3x25xf32>
    %cst_44 = arith.constant 6.250000e-02 : f32
    %137 = vector.broadcast %cst_44 : f32 to vector<1x1xf32>
    %138 = arith.mulf %5, %137 : vector<1x1xf32>
    %139 = vector.shape_cast %138 : vector<1x1xf32> to vector<1x1x1xf32>
    %140 = vector.broadcast %139 : vector<1x1x1xf32> to vector<1x3x25xf32>
    %141 = arith.mulf %136, %140 : vector<1x3x25xf32>
    %142 = vector.shape_cast %119 : vector<1x25xf32> to vector<1x1x25xf32>
    %143 = vector.broadcast %142 : vector<1x1x25xf32> to vector<1x3x25xf32>
    %144 = arith.subf %143, %134 : vector<1x3x25xf32>
    %145 = math.absf %144 : vector<1x3x25xf32>
    %cst_45 = arith.constant dense<0.000000e+00> : vector<1x3xf32>
    %146 = vector.multi_reduction <add>, %145, %cst_45 [2] : vector<1x3x25xf32> to vector<1x3xf32>
    %147 = vector.shape_cast %126 : vector<1x25xf32> to vector<1x1x25xf32>
    %148 = vector.broadcast %147 : vector<1x1x25xf32> to vector<1x3x25xf32>
    %149 = arith.subf %148, %141 : vector<1x3x25xf32>
    %150 = math.absf %149 : vector<1x3x25xf32>
    %cst_46 = arith.constant dense<0.000000e+00> : vector<1x3xf32>
    %151 = vector.multi_reduction <add>, %150, %cst_46 [2] : vector<1x3x25xf32> to vector<1x3xf32>
    %152 = vector.broadcast %4 : vector<1x1xf32> to vector<1x3xf32>
    %153 = arith.divf %146, %152 : vector<1x3xf32>
    %154 = vector.broadcast %5 : vector<1x1xf32> to vector<1x3xf32>
    %155 = arith.divf %151, %154 : vector<1x3xf32>
    %156 = arith.addf %153, %155 : vector<1x3xf32>
    %cst_47 = arith.constant dense<0x7F800000> : vector<1xf32>
    %157 = vector.multi_reduction <minimumf>, %156, %cst_47 [1] : vector<1x3xf32> to vector<1xf32>
    %158 = vector.shape_cast %157 : vector<1xf32> to vector<1x1xf32>
    %159 = tpu.iota {dimensions = array<i32: 1>} : vector<1x3xi32>
    %160 = vector.broadcast %158 : vector<1x1xf32> to vector<1x3xf32>
    %161 = arith.cmpf ole, %156, %160 : vector<1x3xf32>
    %c3_i32 = arith.constant 3 : i32
    %162 = vector.broadcast %c3_i32 : i32 to vector<1x3xi32>
    %163 = arith.select %161, %159, %162 : vector<1x3xi1>, vector<1x3xi32>
    %cst_48 = arith.constant dense<2147483647> : vector<1xi32>
    %164 = vector.multi_reduction <minsi>, %163, %cst_48 [1] : vector<1x3xi32> to vector<1xi32>
    %165 = vector.shape_cast %164 : vector<1xi32> to vector<1x1xi32>
    %166 = vector.extract_strided_slice %38 {offsets = [0, 0], sizes = [1, 1], strides = [1, 1]} : vector<1x58xf32> to vector<1x1xf32>
    %167 = vector.extract_strided_slice %38 {offsets = [0, 1], sizes = [1, 1], strides = [1, 1]} : vector<1x58xf32> to vector<1x1xf32>
    %168 = vector.extract_strided_slice %38 {offsets = [0, 2], sizes = [1, 1], strides = [1, 1]} : vector<1x58xf32> to vector<1x1xf32>
    %169 = vector.extract_strided_slice %38 {offsets = [0, 3], sizes = [1, 1], strides = [1, 1]} : vector<1x58xf32> to vector<1x1xf32>
    %cst_49 = arith.constant 5.000000e-01 : f32
    %170 = vector.broadcast %cst_49 : f32 to vector<1x1xf32>
    %171 = arith.mulf %170, %168 : vector<1x1xf32>
    %172 = arith.subf %166, %171 : vector<1x1xf32>
    %173 = arith.mulf %172, %4 : vector<1x1xf32>
    %cst_50 = arith.constant 5.000000e-01 : f32
    %174 = vector.broadcast %cst_50 : f32 to vector<1x1xf32>
    %175 = arith.mulf %174, %169 : vector<1x1xf32>
    %176 = arith.subf %167, %175 : vector<1x1xf32>
    %177 = arith.mulf %176, %5 : vector<1x1xf32>
    %cst_51 = arith.constant 5.000000e-01 : f32
    %178 = vector.broadcast %cst_51 : f32 to vector<1x1xf32>
    %179 = arith.mulf %178, %168 : vector<1x1xf32>
    %180 = arith.addf %166, %179 : vector<1x1xf32>
    %181 = arith.mulf %180, %4 : vector<1x1xf32>
    %cst_52 = arith.constant 5.000000e-01 : f32
    %182 = vector.broadcast %cst_52 : f32 to vector<1x1xf32>
    %183 = arith.mulf %182, %169 : vector<1x1xf32>
    %184 = arith.addf %167, %183 : vector<1x1xf32>
    %185 = arith.mulf %184, %5 : vector<1x1xf32>
    %186 = vector.extract_strided_slice %38 {offsets = [0, 7], sizes = [1, 51], strides = [1, 1]} : vector<1x58xf32> to vector<1x51xf32>
    %187 = tpu.iota {dimensions = array<i32: 1>} : vector<1x51xi32>
    %c34_i32 = arith.constant 34 : i32
    %188 = vector.broadcast %c34_i32 : i32 to vector<1x51xi32>
    %189 = arith.cmpi slt, %187, %188 : vector<1x51xi32>
    %c1_i32 = arith.constant 1 : i32
    %190 = vector.broadcast %c1_i32 : i32 to vector<1x51xi32>
    %191 = arith.andi %187, %190 : vector<1x51xi32>
    %c0_i32 = arith.constant 0 : i32
    %192 = vector.broadcast %c0_i32 : i32 to vector<1x51xi32>
    %193 = arith.cmpi eq, %191, %192 : vector<1x51xi32>
    %194 = vector.shape_cast %4 : vector<1x1xf32> to vector<1x1xf32>
    %195 = vector.broadcast %194 : vector<1x1xf32> to vector<1x51xf32>
    %196 = vector.shape_cast %5 : vector<1x1xf32> to vector<1x1xf32>
    %197 = vector.broadcast %196 : vector<1x1xf32> to vector<1x51xf32>
    %198 = arith.select %193, %195, %197 : vector<1x51xi1>, vector<1x51xf32>
    %cst_53 = arith.constant 1.000000e+00 : f32
    %199 = vector.broadcast %cst_53 : f32 to vector<1x51xf32>
    %200 = arith.select %189, %198, %199 : vector<1x51xi1>, vector<1x51xf32>
    %201 = arith.mulf %186, %200 : vector<1x51xf32>
    %cst_54 = arith.constant 0.000000e+00 : f32
    %202 = vector.broadcast %cst_54 : f32 to vector<1x205xf32>
    %203 = tpu.concatenate %201, %202 in 1 : vector<1x51xf32>, vector<1x205xf32> -> vector<1x256xf32>
    %204 = arith.sitofp %16 : vector<1x1xi32> to vector<1x1xf32>
    %205 = arith.sitofp %165 : vector<1x1xi32> to vector<1x1xf32>
    %cst_55 = arith.constant 0.000000e+00 : f32
    %206 = vector.broadcast %cst_55 : f32 to vector<1x246xf32>
    %207 = tpu.concatenate %21, %204, %173, %177, %181, %185, %39, %205, %206 in 1 : vector<1x1xf32>, vector<1x1xf32>, vector<1x1xf32>, vector<1x1xf32>, vector<1x1xf32>, vector<1x1xf32>, vector<1x3xf32>, vector<1x1xf32>, vector<1x246xf32> -> vector<1x256xf32>
    %cst_56 = arith.constant 0.000000e+00 : f32
    %208 = vector.broadcast %cst_56 : f32 to vector<1x256xf32>
    %209 = vector.shape_cast %83 : vector<1x256xf32> to vector<1x1x256xf32>
    %210 = vector.shape_cast %90 : vector<1x256xf32> to vector<1x1x256xf32>
    %211 = vector.shape_cast %60 : vector<1x256xf32> to vector<1x1x256xf32>
    %212 = vector.shape_cast %65 : vector<1x256xf32> to vector<1x1x256xf32>
    %213 = vector.shape_cast %70 : vector<1x256xf32> to vector<1x1x256xf32>
    %214 = vector.shape_cast %203 : vector<1x256xf32> to vector<1x1x256xf32>
    %215 = vector.shape_cast %207 : vector<1x256xf32> to vector<1x1x256xf32>
    %216 = vector.shape_cast %208 : vector<1x256xf32> to vector<1x1x256xf32>
    %217 = tpu.concatenate %209, %210, %211, %212, %213, %214, %215, %216 in 1 : vector<1x1x256xf32>, vector<1x1x256xf32>, vector<1x1x256xf32>, vector<1x1x256xf32>, vector<1x1x256xf32>, vector<1x1x256xf32>, vector<1x1x256xf32>, vector<1x1x256xf32> -> vector<1x8x256xf32>
    %c0_57 = arith.constant 0 : index
    %c0_58 = arith.constant 0 : index
    %c0_59 = arith.constant 0 : index
    %218 = vector.load %arg7[%c0_57, %c0_58, %c0_59] : memref<1x8x256xf32, #tpu.memory_space<vmem>>, vector<1x8x256xf32>
    tpu.vector_store %arg7[%c0_57, %c0_58, %c0_59], %217 {strides = array<i32>} : memref<1x8x256xf32, #tpu.memory_space<vmem>>, vector<1x8x256xf32>,
    return
  }
  func.func @transform_0(%arg0: i32) -> (i32, i32, i32) {
    %c0_i32 = arith.constant 0 : i32
    %c0_i32_0 = arith.constant 0 : i32
    %c0_i32_1 = arith.constant 0 : i32
    return %arg0, %c0_i32, %c0_i32_0 : i32, i32, i32
  }
  func.func @transform_1(%arg0: i32) -> (i32, i32, i32) {
    %c0_i32 = arith.constant 0 : i32
    %c0_i32_0 = arith.constant 0 : i32
    %c0_i32_1 = arith.constant 0 : i32
    return %arg0, %c0_i32, %c0_i32_0 : i32, i32, i32
  }
  func.func @transform_2(%arg0: i32) -> (i32, i32, i32) {
    %c0_i32 = arith.constant 0 : i32
    %c0_i32_0 = arith.constant 0 : i32
    %c0_i32_1 = arith.constant 0 : i32
    return %arg0, %c0_i32, %c0_i32_0 : i32, i32, i32
  }
  func.func @transform_3(%arg0: i32) -> (i32, i32, i32, i32) {
    %c0_i32 = arith.constant 0 : i32
    %c0_i32_0 = arith.constant 0 : i32
    %c0_i32_1 = arith.constant 0 : i32
    %c0_i32_2 = arith.constant 0 : i32
    return %arg0, %c0_i32, %c0_i32_0, %c0_i32_1 : i32, i32, i32, i32
  }
  func.func @transform_4(%arg0: i32) -> (i32, i32, i32, i32) {
    %c0_i32 = arith.constant 0 : i32
    %c0_i32_0 = arith.constant 0 : i32
    %c0_i32_1 = arith.constant 0 : i32
    %c0_i32_2 = arith.constant 0 : i32
    return %arg0, %c0_i32, %c0_i32_0, %c0_i32_1 : i32, i32, i32, i32
  }
  func.func @transform_5(%arg0: i32) -> (i32, i32, i32, i32) {
    %c0_i32 = arith.constant 0 : i32
    %c0_i32_0 = arith.constant 0 : i32
    %c0_i32_1 = arith.constant 0 : i32
    %c0_i32_2 = arith.constant 0 : i32
    return %arg0, %c0_i32, %c0_i32_0, %c0_i32_1 : i32, i32, i32, i32
  }
  func.func @transform_6(%arg0: i32) -> (i32, i32, i32) {
    %c0_i32 = arith.constant 0 : i32
    %c0_i32_0 = arith.constant 0 : i32
    %c0_i32_1 = arith.constant 0 : i32
    return %arg0, %c0_i32, %c0_i32_0 : i32, i32, i32
  }
}

</mosaic_0001>

<llo_original>
// kernel: tpu_custom_call.1
$region0: #{tpu_custom_call.1}
  #allocation0 [shape = 'u32[]', space=smem, size = 0x4, offset = 0x4, fixed_abs, tag = 'smem constant byte address 0x4 - core index']
  #allocation1 [shape = 'u32[144,128]{1,0:T(1,128)}', space=vmem, size = 0x12000, scoped, tag = 'internal scratch']
  %s0 = inlined_call_operand.vmem [shape: f32[2,1,4], index: 0, kind: input, shape index: {}]
  %s1 = inlined_call_operand.vmem [shape: f32[2,1,32], index: 1, kind: input, shape index: {}]
  %s2 = inlined_call_operand.vmem [shape: f32[2,8,58], index: 2, kind: input, shape index: {}]
  %s3 = inlined_call_operand.hbm [shape: f32[2,3,8,256], index: 3, kind: input, shape index: {}]
  %s4 = inlined_call_operand.hbm [shape: f32[2,3,8,25], index: 4, kind: input, shape index: {}]
  %s5 = inlined_call_operand.vmem [shape: f32[2,2,3,25], index: 5, kind: input, shape index: {}]
  %s6 = inlined_call_operand.hbm [shape: f32[2,8,256], index: 6, kind: output, shape index: {}]
  %s7 = sld [smem:[#allocation0]]
  $region65: #{tpu_custom_call.1} parent=0
    _
  %s9 = ssub.s32 1, %s7
  %s10 = scalar_select 0, %s9, %s7
  $region1: #{tpu_custom_call.1} parent=0
    #allocation2 [shape = 'u8[49152]{0}', space=vmem, size = 0xc000, scoped, tag = 'input window, operand 3']
    #allocation3 [shape = 's32[2]{0}', space=sflag, size = 0x8, scoped, tag = 'scoped memory for tpu_custom_call.1']
    #allocation4 [shape = 's32[2]{0}', space=sflag, size = 0x8, scoped, tag = 'scoped memory for tpu_custom_call.1']
    #allocation5 [shape = 'u8[24576]{0}', space=vmem, size = 0x6000, scoped, tag = 'input window, operand 4']
    #allocation6 [shape = 's32[2]{0}', space=sflag, size = 0x8, scoped, tag = 'scoped memory for tpu_custom_call.1']
    #allocation7 [shape = 'u8[16384]{0}', space=vmem, size = 0x4000, scoped, tag = 'output window, operand 0']
    %11 = vsyncpa [#allocation3], 0
    %s12 = scalar_lea.sflag [#allocation3], 1
    %13 = vsyncpa %s12, 0
    %14 = vsyncpa [#allocation6], 0
    %s15 = scalar_lea.sflag [#allocation6], 1
    %16 = vsyncpa %s15, 0
    %17 = vsyncpa [#allocation4], 0
    %s18 = scalar_lea.sflag [#allocation4], 1
    %19 = vsyncpa %s18, 0
    loop: start=0, step=1, limit=4
    $region2: #{tpu_custom_call.1} parent=1 // loop_pre_header
      _
    $region3: #{tpu_custom_call.1} parent=1 // loop_header
      %s21 = sphi 0, %s25
      %p22 = scmp.ge.s32.totalorder %s21, 4
      %s31 = sphi 0, %s33
      %s34 = sphi 0, %s31
      %s35 = sphi 0, %s34
      %s51 = sphi 0, %s35
      %s57 = sphi 0, %s59
      %s60 = sphi 0, %s57
      %s61 = sphi 0, %s60
      %s77 = sphi 0, %s61
      %s83 = sphi 0, %s85
      %s86 = sphi 0, %s83
      %s87 = sphi 0, %s86
      %s103 = sphi 0, %s87
      %s109 = sphi 0, %s111
      %s112 = sphi 0, %s109
      %s113 = sphi 0, %s112
      %s129 = sphi 0, %s113
      %s135 = sphi 0, %s137
      %s138 = sphi 0, %s135
      %s139 = sphi 0, %s138
      %s155 = sphi 0, %s139
      %s161 = sphi 0, %s163
      %s164 = sphi 0, %s161
      %s165 = sphi 0, %s164
      %s181 = sphi 0, %s165
      %s187 = sphi 0, %s189
      %s190 = sphi 0, %s187
      %s191 = sphi 0, %s190
      %s207 = sphi 0, %s191
    $region4: #{tpu_custom_call.1} parent=1 // loop_header_branch
      %24 = sbr.rel (%p22) target = $region8
    $region5: #{tpu_custom_call.1} parent=1 // loop_body
      %s26 = ssub.s32 %s21, 1
      %s27 = ssub.s32 %s21, 2
      %s28 = sadd.s32 %s21, 1
      %s29 = ssub.s32 %s21, %s28
      %p30 = scmp.eq.s32.totalorder %s29, 0
      %s32 = sadd.s32 %s31, 1
      %s33 = scalar_select %p30, %s31, %s32
      %p36 = pneg %p30
      %p37 = scmp.eq.s32.totalorder %s21, 1
      %p38 = por %p36, %p37
      %p39 = scmp.ne.s32.totalorder %s31, %s34
      %p40 = scmp.eq.s32.totalorder %s21, 0
      %p41 = por %p39, %p40
      %p42 = scmp.ne.s32.totalorder %s31, %s34
      %p43 = scmp.eq.s32.totalorder %s26, 1
      %p44 = por %p42, %p43
      %p45 = scmp.ne.s32.totalorder %s34, %s35
      %p46 = scmp.eq.s32.totalorder %s26, 0
      %p47 = por %p45, %p46
      %p48 = scmp.ne.s32.totalorder %s34, %s35
      %p49 = scmp.eq.s32.totalorder %s27, 1
      %p50 = por %p48, %p49
      %p52 = scmp.ne.s32.totalorder %s35, %s51
      %p53 = scmp.eq.s32.totalorder %s27, 0
      %p54 = por %p52, %p53
      %s55 = ssub.s32 %s21, %s28
      %p56 = scmp.eq.s32.totalorder %s55, 0
      %s58 = sadd.s32 %s57, 1
      %s59 = scalar_select %p56, %s57, %s58
      %p62 = pneg %p56
      %p63 = scmp.eq.s32.totalorder %s21, 1
      %p64 = por %p62, %p63
      %p65 = scmp.ne.s32.totalorder %s57, %s60
      %p66 = scmp.eq.s32.totalorder %s21, 0
      %p67 = por %p65, %p66
      %p68 = scmp.ne.s32.totalorder %s57, %s60
      %p69 = scmp.eq.s32.totalorder %s26, 1
      %p70 = por %p68, %p69
      %p71 = scmp.ne.s32.totalorder %s60, %s61
      %p72 = scmp.eq.s32.totalorder %s26, 0
      %p73 = por %p71, %p72
      %p74 = scmp.ne.s32.totalorder %s60, %s61
      %p75 = scmp.eq.s32.totalorder %s27, 1
      %p76 = por %p74, %p75
      %p78 = scmp.ne.s32.totalorder %s61, %s77
      %p79 = scmp.eq.s32.totalorder %s27, 0
      %p80 = por %p78, %p79
      %s81 = ssub.s32 %s21, %s28
      %p82 = scmp.eq.s32.totalorder %s81, 0
      %s84 = sadd.s32 %s83, 1
      %s85 = scalar_select %p82, %s83, %s84
      %p88 = pneg %p82
      %p89 = scmp.eq.s32.totalorder %s21, 1
      %p90 = por %p88, %p89
      %p91 = scmp.ne.s32.totalorder %s83, %s86
      %p92 = scmp.eq.s32.totalorder %s21, 0
      %p93 = por %p91, %p92
      %p94 = scmp.ne.s32.totalorder %s83, %s86
      %p95 = scmp.eq.s32.totalorder %s26, 1
      %p96 = por %p94, %p95
      %p97 = scmp.ne.s32.totalorder %s86, %s87
      %p98 = scmp.eq.s32.totalorder %s26, 0
      %p99 = por %p97, %p98
      %p100 = scmp.ne.s32.totalorder %s86, %s87
      %p101 = scmp.eq.s32.totalorder %s27, 1
      %p102 = por %p100, %p101
      %p104 = scmp.ne.s32.totalorder %s87, %s103
      %p105 = scmp.eq.s32.totalorder %s27, 0
      %p106 = por %p104, %p105
      %s107 = ssub.s32 %s21, %s28
      %p108 = scmp.eq.s32.totalorder %s107, 0
      %s110 = sadd.s32 %s109, 1
      %s111 = scalar_select %p108, %s109, %s110
      %p114 = pneg %p108
      %p115 = scmp.eq.s32.totalorder %s21, 1
      %p116 = por %p114, %p115
      %p117 = scmp.ne.s32.totalorder %s109, %s112
      %p118 = scmp.eq.s32.totalorder %s21, 0
      %p119 = por %p117, %p118
      %p120 = scmp.ne.s32.totalorder %s109, %s112
      %p121 = scmp.eq.s32.totalorder %s26, 1
      %p122 = por %p120, %p121
      %p123 = scmp.ne.s32.totalorder %s112, %s113
      %p124 = scmp.eq.s32.totalorder %s26, 0
      %p125 = por %p123, %p124
      %p126 = scmp.ne.s32.totalorder %s112, %s113
      %p127 = scmp.eq.s32.totalorder %s27, 1
      %p128 = por %p126, %p127
      %p130 = scmp.ne.s32.totalorder %s113, %s129
      %p131 = scmp.eq.s32.totalorder %s27, 0
      %p132 = por %p130, %p131
      %s133 = ssub.s32 %s21, %s28
      %p134 = scmp.eq.s32.totalorder %s133, 0
      %s136 = sadd.s32 %s135, 1
      %s137 = scalar_select %p134, %s135, %s136
      %p140 = pneg %p134
      %p141 = scmp.eq.s32.totalorder %s21, 1
      %p142 = por %p140, %p141
      %p143 = scmp.ne.s32.totalorder %s135, %s138
      %p144 = scmp.eq.s32.totalorder %s21, 0
      %p145 = por %p143, %p144
      %p146 = scmp.ne.s32.totalorder %s135, %s138
      %p147 = scmp.eq.s32.totalorder %s26, 1
      %p148 = por %p146, %p147
      %p149 = scmp.ne.s32.totalorder %s138, %s139
      %p150 = scmp.eq.s32.totalorder %s26, 0
      %p151 = por %p149, %p150
      %p152 = scmp.ne.s32.totalorder %s138, %s139
      %p153 = scmp.eq.s32.totalorder %s27, 1
      %p154 = por %p152, %p153
      %p156 = scmp.ne.s32.totalorder %s139, %s155
      %p157 = scmp.eq.s32.totalorder %s27, 0
      %p158 = por %p156, %p157
      %s159 = ssub.s32 %s21, %s28
      %p160 = scmp.eq.s32.totalorder %s159, 0
      %s162 = sadd.s32 %s161, 1
      %s163 = scalar_select %p160, %s161, %s162
      %p166 = pneg %p160
      %p167 = scmp.eq.s32.totalorder %s21, 1
      %p168 = por %p166, %p167
      %p169 = scmp.ne.s32.totalorder %s161, %s164
      %p170 = scmp.eq.s32.totalorder %s21, 0
      %p171 = por %p169, %p170
      %p172 = scmp.ne.s32.totalorder %s161, %s164
      %p173 = scmp.eq.s32.totalorder %s26, 1
      %p174 = por %p172, %p173
      %p175 = scmp.ne.s32.totalorder %s164, %s165
      %p176 = scmp.eq.s32.totalorder %s26, 0
      %p177 = por %p175, %p176
      %p178 = scmp.ne.s32.totalorder %s164, %s165
      %p179 = scmp.eq.s32.totalorder %s27, 1
      %p180 = por %p178, %p179
      %p182 = scmp.ne.s32.totalorder %s165, %s181
      %p183 = scmp.eq.s32.totalorder %s27, 0
      %p184 = por %p182, %p183
      %s185 = ssub.s32 %s21, %s28
      %p186 = scmp.eq.s32.totalorder %s185, 0
      %s188 = sadd.s32 %s187, 1
      %s189 = scalar_select %p186, %s187, %s188
      %p192 = pneg %p186
      %p193 = scmp.eq.s32.totalorder %s21, 1
      %p194 = por %p192, %p193
      %p195 = scmp.ne.s32.totalorder %s187, %s190
      %p196 = scmp.eq.s32.totalorder %s21, 0
      %p197 = por %p195, %p196
      %p198 = scmp.ne.s32.totalorder %s187, %s190
      %p199 = scmp.eq.s32.totalorder %s26, 1
      %p200 = por %p198, %p199
      %p201 = scmp.ne.s32.totalorder %s190, %s191
      %p202 = scmp.eq.s32.totalorder %s26, 0
      %p203 = por %p201, %p202
      %p204 = scmp.ne.s32.totalorder %s190, %s191
      %p205 = scmp.eq.s32.totalorder %s27, 1
      %p206 = por %p204, %p205
      %p208 = scmp.ne.s32.totalorder %s191, %s207
      %p209 = scmp.eq.s32.totalorder %s27, 0
      %p210 = por %p208, %p209
      %p211 = scmp.le.s32.totalorder 1, %s21
      %p212 = scmp.lt.s32.totalorder %s21, 3
      %p213 = pnand %p211, %p212
      %p214 = pneg %p213
      // Predicated region
      $region9: #{tpu_custom_call.1} parent=5 // pred_check
        _
      $region10: #{tpu_custom_call.1} parent=5 // pred_check_branch
        %216 = sbr.rel (%p213) target = $region12
      $region11: #{tpu_custom_call.1} parent=5 // pred_region
        %s217 = ssub.s32 %s21, 1
      $region12: #{tpu_custom_call.1} parent=5 // pred_fallthru
        _
      %p218 = scmp.lt.s32.totalorder %s21, 2
      // Predicated region
      $region13: #{tpu_custom_call.1} parent=5 // pred_check
        %p219 = pneg %p218
      $region14: #{tpu_custom_call.1} parent=5 // pred_check_branch
        %221 = sbr.rel (%p219) target = $region16
      $region15: #{tpu_custom_call.1} parent=5 // pred_region
        // Predicated region
        $region17: #{tpu_custom_call.1} parent=15 // pred_check
          %p222 = pneg %p41
        $region18: #{tpu_custom_call.1} parent=15 // pred_check_branch
          %224 = sbr.rel (%p222) target = $region20
        $region19: #{tpu_custom_call.1} parent=15 // pred_region
          %p225 = scmp.lt.s32.totalorder %s21, 1
          %s226 = scalar_select %p225, %s21, 1
          %s227 = scalar_lea.vmem %s0, %s226
        $region20: #{tpu_custom_call.1} parent=15 // pred_fallthru
          _
        // Predicated region
        $region21: #{tpu_custom_call.1} parent=15 // pred_check
          %p228 = pneg %p67
        $region22: #{tpu_custom_call.1} parent=15 // pred_check_branch
          %230 = sbr.rel (%p228) target = $region24
        $region23: #{tpu_custom_call.1} parent=15 // pred_region
          %p231 = scmp.lt.s32.totalorder %s21, 1
          %s232 = scalar_select %p231, %s21, 1
          %s233 = scalar_lea.vmem %s1, %s232
        $region24: #{tpu_custom_call.1} parent=15 // pred_fallthru
          _
        // Predicated region
        $region25: #{tpu_custom_call.1} parent=15 // pred_check
          %p234 = pneg %p93
        $region26: #{tpu_custom_call.1} parent=15 // pred_check_branch
          %236 = sbr.rel (%p234) target = $region28
        $region27: #{tpu_custom_call.1} parent=15 // pred_region
          %p237 = scmp.lt.s32.totalorder %s21, 1
          %s238 = scalar_select %p237, %s21, 1
          %s239 = smul.addr %s238, 8
          %s240 = scalar_lea.vmem %s2, %s239
        $region28: #{tpu_custom_call.1} parent=15 // pred_fallthru
          _
        // Predicated region
        $region29: #{tpu_custom_call.1} parent=15 // pred_check
          %p241 = pneg %p119
        $region30: #{tpu_custom_call.1} parent=15 // pred_check_branch
          %243 = sbr.rel (%p241) target = $region32
        $region31: #{tpu_custom_call.1} parent=15 // pred_region
          %s244 = sand.u32 %s109, 1
          %s245 = scalar_lea.sflag [#allocation3], %s244
          %s246 = sand.u32 %s109, 1
          %s247 = smul.addr %s246, 48
          %s248 = scalar_lea.vmem [#allocation2], %s247
          %s250 = ssub.s32 768, 768
          %251 = vsyncadd %s245, %s250
          %s252 = smul.addr %s21, 6
          %s253 = smul.addr %s252, 128
          %s254 = scalar_lea.hbm %s3, %s253
          %s255 = sshll.u32 %s248, 4
          %s256 = int_to_ptr.vmem [resolvable:$true] %s255
          %261 = dma.hbm_to_vmem [thread:$0]  %s254, 768, %s256, %s245, 256, 256, 16
        $region32: #{tpu_custom_call.1} parent=15 // pred_fallthru
          _
        // Predicated region
        $region33: #{tpu_custom_call.1} parent=15 // pred_check
          %p262 = pneg %p145
        $region34: #{tpu_custom_call.1} parent=15 // pred_check_branch
          %264 = sbr.rel (%p262) target = $region36
        $region35: #{tpu_custom_call.1} parent=15 // pred_region
          %s265 = sand.u32 %s135, 1
          %s266 = scalar_lea.sflag [#allocation6], %s265
          %s267 = sand.u32 %s135, 1
          %s268 = smul.addr %s267, 24
          %s269 = scalar_lea.vmem [#allocation5], %s268
          %s271 = ssub.s32 384, 384
          %272 = vsyncadd %s266, %s271
          %s273 = smul.addr %s21, 3
          %s274 = smul.addr %s273, 128
          %s275 = scalar_lea.hbm %s4, %s274
          %s276 = sshll.u32 %s269, 4
          %s277 = int_to_ptr.vmem [resolvable:$true] %s276
          %282 = dma.hbm_to_vmem [thread:$0]  %s275, 384, %s277, %s266, 128, 128, 8
        $region36: #{tpu_custom_call.1} parent=15 // pred_fallthru
          _
        // Predicated region
        $region37: #{tpu_custom_call.1} parent=15 // pred_check
          %p283 = pneg %p171
        $region38: #{tpu_custom_call.1} parent=15 // pred_check_branch
          %285 = sbr.rel (%p283) target = $region40
        $region39: #{tpu_custom_call.1} parent=15 // pred_region
          %p286 = scmp.lt.s32.totalorder %s21, 1
          %s287 = scalar_select %p286, %s21, 1
          %s288 = smul.addr %s287, 2
          %s289 = smul.addr %s288, 4
          %s290 = scalar_lea.vmem %s5, %s289
        $region40: #{tpu_custom_call.1} parent=15 // pred_fallthru
          _
      $region16: #{tpu_custom_call.1} parent=5 // pred_fallthru
        _
      %p291 = scmp.le.s32.totalorder 1, %s21
      %p292 = scmp.lt.s32.totalorder %s21, 3
      %p293 = pnand %p291, %p292
      %p294 = pneg %p293
      // Predicated region
      $region41: #{tpu_custom_call.1} parent=5 // pred_check
        _
      $region42: #{tpu_custom_call.1} parent=5 // pred_check_branch
        %296 = sbr.rel (%p293) target = $region44
      $region43: #{tpu_custom_call.1} parent=5 // pred_region
        %s297 = ssub.s32 %s21, 1
        %s298 = sand.u32 %s112, 1
        %s299 = scalar_lea.sflag [#allocation3], %s298
        %s300 = sand.u32 %s112, 1
        %s301 = smul.addr %s300, 48
        %s302 = scalar_lea.vmem [#allocation2], %s301
        // Predicated region
        $region45: #{tpu_custom_call.1} parent=43 // pred_check
          %p303 = pneg %p125
        $region46: #{tpu_custom_call.1} parent=43 // pred_check_branch
          %305 = sbr.rel (%p303) target = $region48
        $region47: #{tpu_custom_call.1} parent=43 // pred_region
          %306 = dma.done %s299, 768
        $region48: #{tpu_custom_call.1} parent=43 // pred_fallthru
          _
        %s307 = sand.u32 %s138, 1
        %s308 = scalar_lea.sflag [#allocation6], %s307
        %s309 = sand.u32 %s138, 1
        %s310 = smul.addr %s309, 24
        %s311 = scalar_lea.vmem [#allocation5], %s310
        // Predicated region
        $region49: #{tpu_custom_call.1} parent=43 // pred_check
          %p312 = pneg %p151
        $region50: #{tpu_custom_call.1} parent=43 // pred_check_branch
          %314 = sbr.rel (%p312) target = $region52
        $region51: #{tpu_custom_call.1} parent=43 // pred_region
          %315 = dma.done %s308, 384
        $region52: #{tpu_custom_call.1} parent=43 // pred_fallthru
          _
        %p316 = scmp.lt.s32.totalorder %s26, 1
        %s317 = scalar_select %p316, %s26, 1
        %s318 = scalar_lea.vmem %s0, %s317
        %p319 = pneg %p47
        %p320 = pneg %p44
        %p321 = scmp.lt.s32.totalorder %s26, 1
        %s322 = scalar_select %p321, %s26, 1
        %s323 = scalar_lea.vmem %s1, %s322
        %p324 = pneg %p73
        %p325 = pneg %p70
        %p326 = scmp.lt.s32.totalorder %s26, 1
        %s327 = scalar_select %p326, %s26, 1
        %s328 = smul.addr %s327, 8
        %s329 = scalar_lea.vmem %s2, %s328
        %p330 = pneg %p99
        %p331 = pneg %p96
        %s332 = sand.u32 %s112, 1
        %s333 = scalar_lea.sflag [#allocation3], %s332
        %s334 = sand.u32 %s112, 1
        %s335 = smul.addr %s334, 48
        %s336 = scalar_lea.vmem [#allocation2], %s335
        %p337 = pneg %p125
        %p338 = pneg %p122
        %s339 = sand.u32 %s138, 1
        %s340 = scalar_lea.sflag [#allocation6], %s339
        %s341 = sand.u32 %s138, 1
        %s342 = smul.addr %s341, 24
        %s343 = scalar_lea.vmem [#allocation5], %s342
        %p344 = pneg %p151
        %p345 = pneg %p148
        %p346 = scmp.lt.s32.totalorder %s26, 1
        %s347 = scalar_select %p346, %s26, 1
        %s348 = smul.addr %s347, 2
        %s349 = smul.addr %s348, 4
        %s350 = scalar_lea.vmem %s5, %s349
        %p351 = pneg %p177
        %p352 = pneg %p174
        %p353 = pneg %p203
        %p354 = pneg %p200
        %s355 = sand.u32 %s190, 1
        %s356 = scalar_lea.sflag [#allocation4], %s355
        %s357 = sand.u32 %s190, 1
        %s358 = smul.addr %s357, 16
        %s359 = scalar_lea.vmem [#allocation7], %s358
        %p360 = scmp.lt.s32.totalorder %s26, 1
        %s361 = scalar_select %p360, %s26, 1
        %s362 = scalar_lea.vmem %s0, %s361
        %p363 = scmp.lt.s32.totalorder %s26, 1
        %s364 = scalar_select %p363, %s26, 1
        %s365 = scalar_lea.vmem %s1, %s364
        %p366 = scmp.lt.s32.totalorder %s26, 1
        %s367 = scalar_select %p366, %s26, 1
        %s368 = smul.addr %s367, 8
        %s369 = scalar_lea.vmem %s2, %s368
        %p370 = scmp.lt.s32.totalorder %s26, 1
        %s371 = scalar_select %p370, %s26, 1
        %s372 = smul.addr %s371, 2
        %s373 = smul.addr %s372, 4
        %s374 = scalar_lea.vmem %s5, %s373
        %v375 = vld [vmem:[%s362] sm:$0x1]
        %v376 = vld [vmem:[%s365] sm:$0x1]
        %vm377 = vcmask 253952
        %v378 = vsel %vm377, %v376, -inf
        %379 = vmax.xlane.f32.xlu0 %v378
        %v380 = vpop.xlane.xlu0 %379
        %v381 = vlaneseq
        %v382 = vand.u32 %v381, 127
        %vm383 = vcmp.ge.f32.partialorder %v376, %v380
        %v384 = vsel %vm383, %v382, 32
        %v385 = vsel %vm377, %v384, 2147483647
        %v386 = vand.u32 %v385, 65535
        %v387 = vshra.s32 %v385, 16
        %v388 = vcvt.s32.f32 %v386
        %v389 = vcvt.s32.f32 %v387
        %390 = vmin.xlane.f32.xlu0 %v389
        %v391 = vpop.xlane.xlu0 %390
        %vm392 = vcmp.eq.f32.partialorder %v389, %v391
        %v393 = vsel %vm392, %v388, inf
        %394 = vmin.xlane.f32.xlu0 %v393
        %v395 = vpop.xlane.xlu0 %394
        %v396 = vcvt.f32.s32 %v395
        %v397 = vcvt.f32.s32 %v391
        %v398 = vshll.u32 %v397, 16
        %v399 = vadd.s32 %v398, %v396
        %v400 = vxor.u32 %v380, 2147483648
        %v401 = vmul.f32 %v400, 1.442695
        %v402 = vpow.pop %v401
        %v403 = vadd.f32 %v402, 1.0
        %v404 = vrcp.pop %v403
        %v405 = vmul.f32 1.0, %v404
        %v406 = vmul.u32 %v382, 4
        %vm407 = vcmp.ge.s32.totalorder %v399, %v406
        %v408 = vadd.s32 %v406, 4
        %vm409 = vcmp.lt.s32.totalorder %v399, %v408
        %vm410 = vmand %vm407, %vm409
        %v411 = vsel %vm410, 1, 0
        %v412 = vcvt.s32.f32 %v411
        %v413 = vld [vmem:[%s369] sm:$0xff]
        %v414 = vlaneseq
        %v415 = vshrl.u32 %v414, 7
        %v416 = vsub.s32 0, %v415
        %v417 = vrot.slane %v412, %v416
        %419 = vbcast.lane.b32.xlu0 %v417, 256
        %v420 = vpop.permute.xlu0 %419
        %v421 = vmul.f32 %v413, %v420
        %vm422 = vcmask 474112
        %v423 = vsel %vm422, %v421, 0.0
        %v424 = vrot.slane %v423, 4
        %v425 = vadd.f32 %v423, %v424
        %v426 = vrot.slane %v425, 2
        %v427 = vadd.f32 %v425, %v426
        %v428 = vrot.slane %v427, 1
        %v429 = vadd.f32 %v427, %v428
        %v430 = vmul.f32 %v375, 0.5
        %v431 = vmul.f32 %v430, 2.0
        %v434 = vunpack.c.l.s4 1966171168
        %v435 = vunpack.c.0.s8 %v434
        %v436 = vlaneseq
        %v437 = vshrl.u32 %v436, 7
        %v438 = vsub.s32 %v435, %v437
        %v439 = vrot.slane %v429, %v438
        %v441 = vunpack.c.l.s4 1966171168
        %v442 = vunpack.c.0.s8 %v441
        %v443 = vlaneseq
        %v444 = vshrl.u32 %v443, 7
        %v445 = vsub.s32 %v442, %v444
        %v446 = vrot.slane %v439, %v445
        %447 = vrot.lane.b32.xlu0 %v446, 124
        %v448 = vpop.permute.xlu0 %447
        %v450 = vmul.f32 %v431, %v448
        %v451 = vadd.f32 %v450, 1e-09
        %v452 = vrcp.pop %v451
        %v453 = vmul.f32 10000.0, %v452
        %v454 = vld [vmem:[%s302] sm:$0xff]
        %v455 = vld [vmem:[%s302 + $0x8] sm:$0xff]
        %v456 = vld [vmem:[%s302 + $0x10] sm:$0xff]
        %v457 = vld [vmem:[%s302 + $0x18] sm:$0xff]
        %v458 = vld [vmem:[%s302 + $0x20] sm:$0xff]
        %v459 = vld [vmem:[%s302 + $0x28] sm:$0xff]
        %v460 = vmul.f32 %v454, %v420
        %v461 = vmul.f32 %v455, %v420
        %v462 = vrot.slane %v460, 4
        %v463 = vadd.f32 %v460, %v462
        %v464 = vrot.slane %v463, 2
        %v465 = vadd.f32 %v463, %v464
        %v466 = vrot.slane %v465, 1
        %v467 = vadd.f32 %v465, %v466
        %v468 = vrot.slane %v461, 4
        %v469 = vadd.f32 %v461, %v468
        %v470 = vrot.slane %v469, 2
        %v471 = vadd.f32 %v469, %v470
        %v472 = vrot.slane %v471, 1
        %v473 = vadd.f32 %v471, %v472
        %v474 = vmul.f32 %v456, %v420
        %v475 = vmul.f32 %v457, %v420
        %v476 = vrot.slane %v474, 4
        %v477 = vadd.f32 %v474, %v476
        %v478 = vrot.slane %v477, 2
        %v479 = vadd.f32 %v477, %v478
        %v480 = vrot.slane %v479, 1
        %v481 = vadd.f32 %v479, %v480
        %v482 = vrot.slane %v475, 4
        %v483 = vadd.f32 %v475, %v482
        %v484 = vrot.slane %v483, 2
        %v485 = vadd.f32 %v483, %v484
        %v486 = vrot.slane %v485, 1
        %v487 = vadd.f32 %v485, %v486
        %v488 = vmul.f32 %v458, %v420
        %v489 = vmul.f32 %v459, %v420
        %v490 = vrot.slane %v488, 4
        %v491 = vadd.f32 %v488, %v490
        %v492 = vrot.slane %v491, 2
        %v493 = vadd.f32 %v491, %v492
        %v494 = vrot.slane %v493, 1
        %v495 = vadd.f32 %v493, %v494
        %v496 = vrot.slane %v489, 4
        %v497 = vadd.f32 %v489, %v496
        %v498 = vrot.slane %v497, 2
        %v499 = vadd.f32 %v497, %v498
        %v500 = vrot.slane %v499, 1
        %v501 = vadd.f32 %v499, %v500
        %503 = vset.pattern.permute.xlu0 0
        %504 = vperm.xlu0 %503, %v453
        %v505 = vpop.permute.xlu0 %504
        %v507 = vlaneseq
        %v508 = vshrl.u32 %v507, 7
        %v509 = vsub.s32 0, %v508
        %v510 = vrot.slane %v505, %v509
        %v511 = vadd.f32 %v495, %v510
        %v512 = vadd.f32 %v501, %v510
        %v513 = vadd.f32 %v511, 1e-09
        %v514 = vadd.f32 %v512, 1e-09
        %v515 = vrcp.pop %v513
        %v516 = vmul.f32 1.0, %v515
        %v517 = vrcp.pop %v514
        %v518 = vmul.f32 1.0, %v517
        %519 = vset.pattern.permute.xlu0 5
        %520 = vperm.xlu0 %519, %v429
        %v521 = vpop.permute.xlu0 %520
        %v523 = vadd.f32 %v467, %v521
        %v524 = vadd.f32 %v473, %v521
        %v525 = vmul.f32 %v523, 5000.0
        %v526 = vmul.f32 %v524, 5000.0
        %v527 = vmul.f32 %v525, %v516
        %v528 = vmul.f32 %v526, %v518
        %530 = vset.pattern.permute.xlu0 0
        %531 = vperm.xlu0 %530, %v430
        %v532 = vpop.permute.xlu0 %531
        %v534 = vlaneseq
        %v535 = vshrl.u32 %v534, 7
        %v536 = vsub.s32 0, %v535
        %v537 = vrot.slane %v532, %v536
        %v538 = vadd.f32 %v527, %v537
        %v539 = vadd.f32 %v528, %v537
        %540 = vset.pattern.permute.xlu0 6
        %541 = vperm.xlu0 %540, %v429
        %v542 = vpop.permute.xlu0 %541
        %v544 = vadd.f32 %v481, %v542
        %v545 = vadd.f32 %v487, %v542
        %v546 = vmul.f32 %v544, 5000.0
        %v547 = vmul.f32 %v545, 5000.0
        %v548 = vmul.f32 %v546, %v516
        %v549 = vmul.f32 %v547, %v518
        %550 = vset.pattern.permute.xlu0 1
        %551 = vperm.xlu0 %550, %v430
        %v552 = vpop.permute.xlu0 %551
        %v554 = vlaneseq
        %v555 = vshrl.u32 %v554, 7
        %v556 = vsub.s32 0, %v555
        %v557 = vrot.slane %v552, %v556
        %v558 = vadd.f32 %v548, %v557
        %v559 = vadd.f32 %v549, %v557
        %v560 = vld [vmem:[%s311] sm:$0xff]
        %v561 = vld [vmem:[%s311 + $0x8] sm:$0xff]
        %v562 = vld [vmem:[%s311 + $0x10] sm:$0xff]
        %v563 = vmul.f32 %v560, %v420
        %vm564 = vcmask 203776
        %v565 = vsel %vm564, %v563, 0.0
        %v566 = vrot.slane %v565, 4
        %v567 = vadd.f32 %v565, %v566
        %v568 = vrot.slane %v567, 2
        %v569 = vadd.f32 %v567, %v568
        %v570 = vrot.slane %v569, 1
        %v571 = vadd.f32 %v569, %v570
        %v572 = vmul.f32 %v561, %v420
        %v573 = vsel %vm564, %v572, 0.0
        %v574 = vrot.slane %v573, 4
        %v575 = vadd.f32 %v573, %v574
        %v576 = vrot.slane %v575, 2
        %v577 = vadd.f32 %v575, %v576
        %v578 = vrot.slane %v577, 1
        %v579 = vadd.f32 %v577, %v578
        %v580 = vmul.f32 %v562, %v420
        %v581 = vsel %vm564, %v580, 0.0
        %v582 = vrot.slane %v581, 4
        %v583 = vadd.f32 %v581, %v582
        %v584 = vrot.slane %v583, 2
        %v585 = vadd.f32 %v583, %v584
        %v586 = vrot.slane %v585, 1
        %v587 = vadd.f32 %v585, %v586
        %v588 = vadd.f32 %v587, %v510
        %v589 = vadd.f32 %v588, 1e-09
        %v590 = vrcp.pop %v589
        %v591 = vmul.f32 1.0, %v590
        %v592 = vadd.f32 %v571, %v521
        %v593 = vmul.f32 %v592, 5000.0
        %v594 = vmul.f32 %v593, %v591
        %v595 = vadd.f32 %v594, %v537
        %v596 = vadd.f32 %v579, %v542
        %v597 = vmul.f32 %v596, 5000.0
        %v598 = vmul.f32 %v597, %v591
        %v599 = vadd.f32 %v598, %v557
        %v600 = vld [vmem:[%s374] sm:$0x7]
        %v601 = vld [vmem:[%s374 + $0x4] sm:$0x7]
        %v602 = vmul.f32 %v375, 0.083333336
        %v604 = vlaneseq
        %v605 = vshrl.u32 %v604, 7
        %v606 = vsub.s32 0, %v605
        %v607 = vrot.slane %v602, %v606
        %608 = vset.pattern.permute.xlu0 2
        %609 = vperm.xlu0 %608, %v607
        %v610 = vpop.permute.xlu0 %609
        %v612 = vmul.f32 %v600, %v610
        %v613 = vmul.f32 %v375, 0.0625
        %v615 = vlaneseq
        %v616 = vshrl.u32 %v615, 7
        %v617 = vsub.s32 0, %v616
        %v618 = vrot.slane %v613, %v617
        %619 = vset.pattern.permute.xlu0 3
        %620 = vperm.xlu0 %619, %v618
        %v621 = vpop.permute.xlu0 %620
        %v623 = vmul.f32 %v601, %v621
        %v624 = vsub.f32 %v595, %v612
        %v625 = vand.u32 2147483647, %v624
        %vm626 = vcmask 198656
        %v627 = vsel %vm626, %v625, 0.0
        %628 = vadd.xlane.f32.xlu0 %v627
        %v629 = vpop.xlane.xlu0 %628
        %v630 = vsub.f32 %v599, %v623
        %v631 = vand.u32 2147483647, %v630
        %v632 = vsel %vm626, %v631, 0.0
        %633 = vadd.xlane.f32.xlu0 %v632
        %v634 = vpop.xlane.xlu0 %633
        %636 = vset.pattern.permute.xlu0 2
        %637 = vperm.xlu0 %636, %v375
        %v638 = vpop.permute.xlu0 %637
        %v640 = vlaneseq
        %v641 = vshrl.u32 %v640, 7
        %v642 = vsub.s32 0, %v641
        %v643 = vrot.slane %v638, %v642
        %v644 = vrcp.pop %v643
        %v645 = vmul.f32 %v629, %v644
        %646 = vset.pattern.permute.xlu0 3
        %647 = vperm.xlu0 %646, %v375
        %v648 = vpop.permute.xlu0 %647
        %v650 = vlaneseq
        %v651 = vshrl.u32 %v650, 7
        %v652 = vsub.s32 0, %v651
        %v653 = vrot.slane %v648, %v652
        %v654 = vrcp.pop %v653
        %v655 = vmul.f32 %v634, %v654
        %v656 = vadd.f32 %v645, %v655
        %vm657 = vcmask 1042432
        %v658 = vsel %vm657, %v656, inf
        %v659 = vrot.slane %v658, 4
        %v660 = vmin.f32 %v658, %v659
        %v661 = vrot.slane %v660, 2
        %v662 = vmin.f32 %v660, %v661
        %v663 = vrot.slane %v662, 1
        %v664 = vmin.f32 %v662, %v663
        %vm665 = vcmp.le.f32.partialorder %v656, %v664
        %667 = vbcast.lane.b32.xlu0 %v382, 256
        %v668 = vpop.permute.xlu0 %667
        %v669 = vsel %vm665, %v668, 3
        %vm670 = vcmask 2048
        %v671 = vsel %vm670, %v669, 2147483647
        %v672 = vrot.slane %v671, 4
        %vm673 = vcmp.lt.s32.totalorder %v671, %v672
        %v674 = vsel %vm673, %v671, %v672
        %v675 = vrot.slane %v674, 2
        %vm676 = vcmp.lt.s32.totalorder %v674, %v675
        %v677 = vsel %vm676, %v674, %v675
        %v678 = vrot.slane %v677, 1
        %vm679 = vcmp.lt.s32.totalorder %v677, %v678
        %v680 = vsel %vm679, %v677, %v678
        %v681 = vmul.f32 %v429, 0.5
        %683 = vrot.lane.b32.xlu0 %v681, 126
        %v684 = vpop.permute.xlu0 %683
        %v686 = vsub.f32 %v429, %v684
        %v687 = vlaneseq
        %v688 = vshrl.u32 %v687, 7
        %v689 = vsub.s32 0, %v688
        %v690 = vrot.slane %v375, %v689
        %691 = vrot.lane.b32.xlu0 %v690, 126
        %v692 = vpop.permute.xlu0 %691
        %v694 = vmul.f32 %v686, %v692
        %v695 = vadd.f32 %v429, %v684
        %v696 = vmul.f32 %v695, %v692
        %vm697 = vcmp.lt.s32.totalorder %v382, 34
        %v698 = vand.u32 %v382, 1
        %vm699 = vcmp.eq.s32.totalorder %v698, 0
        %v700 = vsel %vm699, %v643, %v653
        %v701 = vsel %vm697, %v700, 1.0
        %703 = vrot.lane.b32.xlu0 %v701, 7
        %v704 = vpop.permute.xlu0 %703
        %v706 = vmul.f32 %v429, %v704
        %708 = vrot.lane.b32.xlu0 %v706, 121
        %v709 = vpop.permute.xlu0 %708
        %vm711 = vcmask 416768
        %v712 = vsel %vm711, %v709, 0.0
        %v713 = vcvt.s32.f32 %v399
        %v714 = vcvt.s32.f32 %v680
        %716 = vrot.lane.b32.xlu0 %v694, 2
        %v717 = vpop.permute.xlu0 %716
        %720 = vrot.lane.b32.xlu0 %v696, 4
        %v721 = vpop.permute.xlu0 %720
        %723 = vrot.lane.b32.xlu0 %v429, 2
        %v724 = vpop.permute.xlu0 %723
        %727 = vrot.lane.b32.xlu0 %v714, 9
        %v728 = vpop.permute.xlu0 %727
        %vm730 = vcmask 7168
        %v731 = vsel %vm730, %v405, %v713
        %vm732 = vcmask 15360
        %v733 = vsel %vm732, %v731, %v717
        %vm734 = vcmask 23552
        %v735 = vsel %vm734, %v733, %v717
        %vm736 = vcmask 31744
        %v737 = vsel %vm736, %v735, %v721
        %vm738 = vcmask 39936
        %v739 = vsel %vm738, %v737, %v721
        %vm740 = vcmask 48128
        %v741 = vsel %vm740, %v739, %v724
        %vm742 = vcmask 72704
        %v743 = vsel %vm742, %v741, %v728
        %vm744 = vcmask 80896
        %v745 = vsel %vm744, %v743, 0.0
        %v748 = vrot.slane %v712, 3
        %v749 = vrot.slane 0.0, 3
        %v753 = vrot.slane %v745, 2
        %v754 = vrot.slane 0.0, 2
        %vm757 = vcmask 1040384
        %v758 = vsel %vm757, %v538, %v558
        %v759 = vsel %vm757, %v539, %v559
        %vm760 = vcmask 1041408
        %v761 = vsel %vm760, %v758, %v467
        %v762 = vsel %vm760, %v759, %v473
        %v763 = vsel %vm657, %v761, %v481
        %v764 = vsel %vm657, %v762, %v487
        %vm765 = vcmask 1043456
        %v766 = vsel %vm765, %v763, %v495
        %v767 = vsel %vm765, %v764, %v501
        %vm768 = vcmask 1044480
        %v769 = vsel %vm768, %v766, %v748
        %v770 = vsel %vm768, %v767, %v749
        %vm771 = vcmask 1045504
        %v772 = vsel %vm771, %v769, %v753
        %v773 = vsel %vm771, %v770, %v754
        %vm774 = vcmask 1046528
        %v775 = vsel %vm774, %v772, 0.0
        %v776 = vsel %vm774, %v773, 0.0
        %777 = vst [vmem:[%s359] sm:$0xff] %v775
        %778 = vst [vmem:[%s359 + $0x8] sm:$0xff] %v776
        %s779 = sand.u32 %s190, 1
        %s780 = scalar_lea.sflag [#allocation4], %s779
        %s781 = sand.u32 %s190, 1
        %s782 = smul.addr %s781, 16
        %s783 = scalar_lea.vmem [#allocation7], %s782
        // Predicated region
        $region53: #{tpu_custom_call.1} parent=43 // pred_check
          %p784 = pneg %p200
        $region54: #{tpu_custom_call.1} parent=43 // pred_check_branch
          %786 = sbr.rel (%p784) target = $region56
        $region55: #{tpu_custom_call.1} parent=43 // pred_region
          %s788 = ssub.s32 256, 256
          %789 = vsyncadd %s780, %s788
          %s790 = smul.addr %s26, 2
          %s791 = smul.addr %s790, 128
          %s792 = scalar_lea.hbm %s6, %s791
          %s794 = sshll.u32 %s783, 4
          %s795 = int_to_ptr.vmem [resolvable:$true] %s794
          %797 = dma.vmem_to_hbm [thread:$0]  %s795, 256, %s792, %s780
        $region56: #{tpu_custom_call.1} parent=43 // pred_fallthru
          _
      $region44: #{tpu_custom_call.1} parent=5 // pred_fallthru
        _
      %p798 = scmp.le.s32.totalorder 2, %s21
      // Predicated region
      $region57: #{tpu_custom_call.1} parent=5 // pred_check
        %p799 = pneg %p798
      $region58: #{tpu_custom_call.1} parent=5 // pred_check_branch
        %801 = sbr.rel (%p799) target = $region60
      $region59: #{tpu_custom_call.1} parent=5 // pred_region
        %s802 = ssub.s32 %s21, 2
        // Predicated region
        $region61: #{tpu_custom_call.1} parent=59 // pred_check
          %p803 = pneg %p206
        $region62: #{tpu_custom_call.1} parent=59 // pred_check_branch
          %805 = sbr.rel (%p803) target = $region64
        $region63: #{tpu_custom_call.1} parent=59 // pred_region
          %s806 = sand.u32 %s191, 1
          %s807 = scalar_lea.sflag [#allocation4], %s806
          %s808 = sand.u32 %s191, 1
          %s809 = smul.addr %s808, 16
          %s810 = scalar_lea.vmem [#allocation7], %s809
          %811 = dma.done %s807, 256
        $region64: #{tpu_custom_call.1} parent=59 // pred_fallthru
          _
      $region60: #{tpu_custom_call.1} parent=5 // pred_fallthru
        _
    $region6: #{tpu_custom_call.1} parent=1 // loop_footer
      %s25 = sadd.s32 1, %s21
    $region7: #{tpu_custom_call.1} parent=1 // loop_footer_branch
      %20 = sbr.rel target = $region3
    $region8: #{tpu_custom_call.1} parent=1 // loop_exit
      _
    %812 = vsyncpa [#allocation3], 1
    %s813 = scalar_lea.sflag [#allocation3], 1
    %814 = vsyncpa %s813, 1
    %815 = vsyncpa [#allocation6], 1
    %s816 = scalar_lea.sflag [#allocation6], 1
    %817 = vsyncpa %s816, 1
    %818 = vsyncpa [#allocation4], 1
    %s819 = scalar_lea.sflag [#allocation4], 1
    %820 = vsyncpa %s819, 1

</llo_original>
